<compile_context>
chip_gen: v7x
topology: tpu7x:2x2x1
jax: 0.10.0
libtpu: 0.0.40
codegen_flags: <defaults>
</compile_context>

<pallas_src>
import jax
import jax.numpy as jnp
from jax.experimental import pallas as pl
from jax.experimental.pallas import tpu as pltpu

# ----- configuration mirroring RaserConfig fields used by TPIfCNN -----
PAST_OBS = 4                       # input_shape[0]
FEAT_LEN = 17                      # input_shape[1]
META = 1                           # meta_shape
SPECTRUM = FEAT_LEN - META         # 16
OUT_SHAPE = 2
KERNEL = 3                         # config.cnn.kernel_size
FILTERS = 4                        # config.cnn.filters
STRIDE = 1
PADDING = 0
HIDDEN = 32                        # config.hidden
TPI_INCLUDED = True
BN_EPS = 1e-5
BN_SCALE = 1.0 / (1.0 + BN_EPS) ** 0.5   # eval-mode BatchNorm1d(num_features=1)

L1 = (SPECTRUM + 2 * PADDING - KERNEL) // STRIDE + 1   # 14
L2 = (L1 + 2 * PADDING - KERNEL) // STRIDE + 1         # 12 (self.outshape)
CONV1_N = FILTERS * L1                                  # 56
CONV2_N = FILTERS * L2                                  # 48
SPEC_IN = PAST_OBS * SPECTRUM                           # 64
C1_BD = PAST_OBS * CONV1_N                              # 224 (block-diag conv1 width)
C2_BD = PAST_OBS * CONV2_N                              # 192 (block-diag conv2 width)
META_PAD = 16                                           # meta cols padded (bf16 16-row tiles)
TPI_SHAPE = PAST_OBS if TPI_INCLUDED else 0
IN_FEATS = CONV2_N * PAST_OBS + TPI_SHAPE               # 196

# packed hidden-weight buffer row offsets (all multiples of 16 for bf16 sublane tiling)
WHID_WCC = 0                        # (192, 32) conv rows of concat layer
WHID_WCM = C2_BD                    # 192: (16, 32) meta rows (only first 4 valid)
WHID_WM = WHID_WCM + META_PAD       # 208: (32, 32) middle fc, BN scale folded
WHID_WO = WHID_WM + HIDDEN          # 240: (32, 32) layer_out, BN folded, cols>=2 zero
WHID_WS = WHID_WO + HIDDEN          # 272: (32, 32) smooth layer, rows/cols>=2 zero
WHID_ROWS = WHID_WS + HIDDEN        # 304

BLOCK_B = 1024                      # max batch rows per grid step


def _round_up(n, m):
    return ((n + m - 1) // m) * m


# ---------------- fused forward kernel ----------------
def _tpif_cnn_kernel(spec_ref, meta_ref, wbig_ref, whid_ref, bias_ref, out_ref):
    # spec_ref: (BT, 64) flattened spectra, meta_ref: (BT, 16) TPI cols (cols>=4 zero)
    spec = spec_ref[...].astype(jnp.bfloat16)
    meta = meta_ref[...].astype(jnp.bfloat16)

    w1 = wbig_ref[0:SPEC_IN, :]                             # (64, 224)  bf16
    w2 = wbig_ref[SPEC_IN:SPEC_IN + C1_BD, 0:C2_BD]         # (224, 192) bf16
    wcc = whid_ref[WHID_WCC:WHID_WCM, :]                    # (192, 32)
    wcm = whid_ref[WHID_WCM:WHID_WM, :]                     # (16, 32) zero-padded rows
    wm = whid_ref[WHID_WM:WHID_WO, :]                       # (32, 32)  BN folded
    wo = whid_ref[WHID_WO:WHID_WS, :]                       # (32, 32)  BN folded, padded
    ws = whid_ref[WHID_WS:WHID_ROWS, :]                     # (32, 32)  padded

    b1 = bias_ref[0:1, :]                                   # (1, 224) f32
    b2 = bias_ref[1:2, 0:C2_BD]                             # (1, 192)
    bc = bias_ref[2:3, 0:HIDDEN]
    bm = bias_ref[3:4, 0:HIDDEN]
    bo = bias_ref[4:5, 0:HIDDEN]                            # cols >= 2 are zero
    bs = bias_ref[5:6, 0:HIDDEN]                            # cols >= 2 are zero

    # conv block 1 (all past-obs fused, block-diagonal GEMM): Conv1d(1->F) -> ReLU
    h1 = jnp.dot(spec, w1, preferred_element_type=jnp.float32) + b1
    h1 = jnp.maximum(h1, 0.0)                               # (BT, 224)
    # conv block 2: Conv1d(F->F) -> ReLU (Dropout = identity in eval)
    h2 = jnp.dot(h1.astype(jnp.bfloat16), w2, preferred_element_type=jnp.float32) + b2
    h2 = jnp.maximum(h2, 0.0)                               # (BT, 192)
    # concat_layer: Linear over [conv feats | TPI meta] -> ReLU (BN scale folded into wm)
    acc = jnp.dot(h2.astype(jnp.bfloat16), wcc, preferred_element_type=jnp.float32)
    acc = acc + jnp.dot(meta, wcm, preferred_element_type=jnp.float32) + bc
    h = jnp.maximum(acc, 0.0)                               # (BT, 32)
    # middle fc layer: Linear -> ReLU (BN scale folded into wo)
    h = jnp.dot(h.astype(jnp.bfloat16), wm, preferred_element_type=jnp.float32) + bm
    h = jnp.maximum(h, 0.0)
    # layer_out: Linear -> ReLU (output lanes padded to 32; padded lanes stay exactly 0)
    y = jnp.dot(h.astype(jnp.bfloat16), wo, preferred_element_type=jnp.float32) + bo
    y = jnp.maximum(y, 0.0)
    # smooth_layer: Linear -> Softplus (beta=1, threshold=20)
    z = jnp.dot(y.astype(jnp.bfloat16), ws, preferred_element_type=jnp.float32) + bs
    z = z[:, :OUT_SHAPE]
    out_ref[...] = jnp.where(z > 20.0, z, jnp.log1p(jnp.exp(jnp.minimum(z, 20.0))))


# ---------------- dense (im2col-folded) conv weight construction ----------------
def _dense_conv1_weights(w1):
    # w1: (K, F) -> (SPECTRUM, F*L1) with W[s, f*L1+l] = w1[s-l, f] if 0<=s-l<K
    s = jnp.arange(SPECTRUM)[:, None, None]
    f = jnp.arange(FILTERS)[None, :, None]
    l = jnp.arange(L1)[None, None, :]
    j = s - l
    valid = (j >= 0) & (j < KERNEL)
    vals = w1[jnp.clip(j, 0, KERNEL - 1), f]                # (SPECTRUM, F, L1)
    return jnp.where(valid, vals, 0.0).reshape(SPECTRUM, CONV1_N)


def _dense_conv2_weights(w2):
    # w2: (K, Cin=F, Cout=F) -> (F*L1, F*L2) with W[fi*L1+l1, fo*L2+l2] = w2[l1-l2, fi, fo]
    fi = jnp.arange(FILTERS)[:, None, None, None]
    l1 = jnp.arange(L1)[None, :, None, None]
    fo = jnp.arange(FILTERS)[None, None, :, None]
    l2 = jnp.arange(L2)[None, None, None, :]
    j = l1 - l2
    valid = (j >= 0) & (j < KERNEL)
    vals = w2[jnp.clip(j, 0, KERNEL - 1), fi, fo]           # (F, L1, F, L2)
    return jnp.where(valid, vals, 0.0).reshape(CONV1_N, CONV2_N)


def _pack_params(conv_params, fc_params):
    """Build block-diagonal conv GEMM weights and pack everything into 3 buffers."""
    w1, b1, w2, b2 = conv_params
    wc, bc, wm, bm, wo, bo, ws, bs = fc_params

    w1d = _dense_conv1_weights(w1)                          # (16, 56)
    w2d = _dense_conv2_weights(w2)                          # (56, 48)
    eye = jnp.eye(PAST_OBS, dtype=jnp.float32)
    w1_bd = jnp.kron(eye, w1d)                              # (64, 224) block-diag
    w2_bd = jnp.kron(eye, w2d)                              # (224, 192) block-diag
    b1_bd = jnp.tile(jnp.repeat(b1, L1, axis=1), (1, PAST_OBS))   # (1, 224)
    b2_bd = jnp.tile(jnp.repeat(b2, L2, axis=1), (1, PAST_OBS))   # (1, 192)

    # concat_layer rows, torch cat order per p: [48 conv feats | 1 meta]
    wc_r = wc.reshape(PAST_OBS, CONV2_N + META, HIDDEN)
    wcc = wc_r[:, :CONV2_N, :].reshape(PAST_OBS * CONV2_N, HIDDEN)  # (192, 32)
    wcm = wc_r[:, CONV2_N:, :].reshape(PAST_OBS, HIDDEN)            # (4, 32)

    wbig = jnp.zeros((SPEC_IN + C1_BD, C1_BD), jnp.float32)
    wbig = wbig.at[:SPEC_IN, :].set(w1_bd)
    wbig = wbig.at[SPEC_IN:, :C2_BD].set(w2_bd)

    whid = jnp.zeros((WHID_ROWS, HIDDEN), jnp.float32)
    whid = whid.at[WHID_WCC:WHID_WCC + PAST_OBS * CONV2_N, :].set(wcc)
    whid = whid.at[WHID_WCM:WHID_WCM + PAST_OBS, :].set(wcm)
    whid = whid.at[WHID_WM:WHID_WM + HIDDEN, :].set(wm * BN_SCALE)          # BN fold #1
    whid = whid.at[WHID_WO:WHID_WO + HIDDEN, :OUT_SHAPE].set(wo * BN_SCALE)  # BN fold #2
    whid = whid.at[WHID_WS:WHID_WS + OUT_SHAPE, :OUT_SHAPE].set(ws)

    bias = jnp.zeros((8, C1_BD), jnp.float32)
    bias = bias.at[0, :].set(b1_bd[0])
    bias = bias.at[1, :C2_BD].set(b2_bd[0])
    bias = bias.at[2, :HIDDEN].set(bc[0])
    bias = bias.at[3, :HIDDEN].set(bm[0])
    bias = bias.at[4, :OUT_SHAPE].set(bo[0])
    bias = bias.at[5, :OUT_SHAPE].set(bs[0])

    return wbig.astype(jnp.bfloat16), whid.astype(jnp.bfloat16), bias


# ---------------- full forward ----------------
@jax.jit
def tpif_cnn_forward(inputs, conv_params, fc_params):
    B = inputs.shape[0]
    wbig, whid, bias = _pack_params(conv_params, fc_params)

    # Batch tiling: minimize pad rows; keep >= 2 grid steps when the batch allows so
    # both v7x TensorCores get work (grid axis is "parallel"); sublane-multiple tiles.
    n_steps = -(-B // BLOCK_B)
    if B > 8:
        n_steps = max(n_steps, 2)
    bt = _round_up(-(-B // n_steps), 8)
    b_pad = _round_up(B, bt)
    grid = b_pad // bt

    # Split spec / meta in the wrapper -> no unaligned lane slicing inside the kernel.
    spec = inputs[:, :, :SPECTRUM].reshape(B, SPEC_IN)                  # (B, 64)
    meta = inputs[:, :, SPECTRUM:].reshape(B, PAST_OBS * META)          # (B, 4)
    spec = jnp.pad(spec, ((0, b_pad - B), (0, 0)))
    meta = jnp.pad(meta, ((0, b_pad - B), (0, META_PAD - PAST_OBS * META)))

    out = pl.pallas_call(
        _tpif_cnn_kernel,
        out_shape=jax.ShapeDtypeStruct((b_pad, OUT_SHAPE), jnp.float32),
        grid=(grid,),
        in_specs=[
            pl.BlockSpec((bt, SPEC_IN), lambda i: (i, 0)),
            pl.BlockSpec((bt, META_PAD), lambda i: (i, 0)),
            pl.BlockSpec((SPEC_IN + C1_BD, C1_BD), lambda i: (0, 0)),
            pl.BlockSpec((WHID_ROWS, HIDDEN), lambda i: (0, 0)),
            pl.BlockSpec((8, C1_BD), lambda i: (0, 0)),
        ],
        out_specs=pl.BlockSpec((bt, OUT_SHAPE), lambda i: (i, 0)),
        compiler_params=pltpu.CompilerParams(
            dimension_semantics=("parallel",)),
    )(spec, meta, wbig, whid, bias)

    return out[:B]                                          # == x.squeeze() for B > 1


# ---------------- pure-JAX reference (direct conv, f32, for correctness check) ----------------
def reference_forward(inputs, conv_params, fc_params):
    w1, b1, w2, b2 = conv_params
    wc, bc, wm, bm, wo, bo, ws, bs = fc_params
    B = inputs.shape[0]
    conv_part = inputs[:, :, :SPECTRUM]
    fc_part = inputs[:, :, SPECTRUM:]
    feats = []
    for p in range(PAST_OBS):
        x = conv_part[:, p]                                 # (B, 16)
        h1 = jnp.stack([
            b1[0, f] + sum(x[:, j:j + L1] * w1[j, f] for j in range(KERNEL))
            for f in range(FILTERS)], axis=1)
        h1 = jnp.maximum(h1, 0.0)                           # (B, F, L1)
        h2 = jnp.stack([
            b2[0, fo] + sum(h1[:, fi, j:j + L2] * w2[j, fi, fo]
                            for j in range(KERNEL) for fi in range(FILTERS))
            for fo in range(FILTERS)], axis=1)
        h2 = jnp.maximum(h2, 0.0)                           # (B, F, L2)
        feats.append(h2.reshape(B, FILTERS * L2))
    features = jnp.stack(feats, axis=1)                     # (B, P, 48)
    combined = jnp.concatenate([features, fc_part], axis=2).reshape(B, -1)
    h = jnp.maximum(combined @ wc + bc, 0.0) * BN_SCALE
    h = jnp.maximum(h @ wm + bm, 0.0) * BN_SCALE
    y = jnp.maximum(h @ wo + bo, 0.0)
    z = y @ ws + bs
    return jnp.where(z > 20.0, z, jnp.log1p(jnp.exp(jnp.minimum(z, 20.0))))


# ---------------- deterministic parameter init ----------------
def init_params(key):
    ks = jax.random.split(key, 10)

    def nrm(k, shape, scale):
        return (scale * jax.random.normal(k, shape)).astype(jnp.float32)

    w1 = nrm(ks[0], (KERNEL, FILTERS), 0.3)            # Conv1d(1->F), taps-major layout
    b1 = nrm(ks[1], (1, FILTERS), 0.1)
    w2 = nrm(ks[2], (KERNEL, FILTERS, FILTERS), 0.2)   # Conv1d(F->F), (K, Cin, Cout)
    b2 = nrm(ks[3], (1, FILTERS), 0.1)
    conv_params = (w1, b1, w2, b2)

    wc = nrm(ks[4], (IN_FEATS, HIDDEN), 0.05)
    bc = nrm(ks[5], (1, HIDDEN), 0.05)
    wm = nrm(ks[6], (HIDDEN, HIDDEN), 0.1)
    bm = nrm(ks[7], (1, HIDDEN), 0.05)
    wo = nrm(ks[8], (HIDDEN, OUT_SHAPE), 0.1)
    bo = jnp.zeros((1, OUT_SHAPE), jnp.float32)
    ws = nrm(ks[9], (OUT_SHAPE, OUT_SHAPE), 0.5)
    bs = jnp.zeros((1, OUT_SHAPE), jnp.float32)
    fc_params = (wc, bc, wm, bm, wo, bo, ws, bs)
    return conv_params, fc_params


if __name__ == "__main__":
    key = jax.random.PRNGKey(0)
    k_in, k_in2, k_par = jax.random.split(key, 3)
    conv_params, fc_params = init_params(k_par)

    # small batch (module convention: (N, past_obs, input_shape[1]))
    B = 2
    x = jax.random.normal(k_in, (B, PAST_OBS, FEAT_LEN), dtype=jnp.float32)
    y = jax.block_until_ready(tpif_cnn_forward(x, conv_params, fc_params))
    assert y.shape == (B, OUT_SHAPE), y.shape
    assert bool(jnp.all(jnp.isfinite(y)))
    y_ref = reference_forward(x, conv_params, fc_params)
    assert jnp.allclose(y, y_ref, rtol=2e-2, atol=2e-2), (y, y_ref)

    # larger, non-multiple batch exercises batch tiling + minimal padding + 2 grid steps
    B2 = 300
    x2 = jax.random.normal(k_in2, (B2, PAST_OBS, FEAT_LEN), dtype=jnp.float32)
    y2 = jax.block_until_ready(tpif_cnn_forward(x2, conv_params, fc_params))
    assert y2.shape == (B2, OUT_SHAPE), y2.shape
    assert bool(jnp.all(jnp.isfinite(y2)))
    y2_ref = reference_forward(x2, conv_params, fc_params)
    assert jnp.allclose(y2, y2_ref, rtol=2e-2, atol=2e-2)

    print("KERNEL_OK")
</pallas_src>

<mosaic_0001>
module attributes {stable_mosaic.version = 11 : i64} {
  func.func @_tpif_cnn_kernel(%arg0: i32, %arg1: memref<8x64xf32, #tpu.memory_space<vmem>>, %arg2: memref<8x16xf32, #tpu.memory_space<vmem>>, %arg3: memref<288x224xbf16, #tpu.memory_space<vmem>>, %arg4: memref<304x32xbf16, #tpu.memory_space<vmem>>, %arg5: memref<8x224xf32, #tpu.memory_space<vmem>>, %arg6: memref<8x2xf32, #tpu.memory_space<vmem>>) attributes {dimension_semantics = [#tpu.dimension_semantics<parallel>], iteration_bounds = array<i64: 1>, scalar_prefetch = 0 : i64, scratch_operands = 0 : i64, tpu.core_type = #tpu.core_type<tc>, window_params = [{transform_indices = @transform_0, window_bounds = array<i64: 8, 64>}, {transform_indices = @transform_1, window_bounds = array<i64: 8, 16>}, {pipeline_mode = #tpu.pipeline_mode<synchronous>, transform_indices = @transform_2, window_bounds = array<i64: 288, 224>}, {pipeline_mode = #tpu.pipeline_mode<synchronous>, transform_indices = @transform_3, window_bounds = array<i64: 304, 32>}, {pipeline_mode = #tpu.pipeline_mode<synchronous>, transform_indices = @transform_4, window_bounds = array<i64: 8, 224>}, {transform_indices = @transform_5, window_bounds = array<i64: 8, 2>}]} {
    %c0 = arith.constant 0 : index
    %c0_0 = arith.constant 0 : index
    %0 = vector.load %arg1[%c0, %c0_0] : memref<8x64xf32, #tpu.memory_space<vmem>>, vector<8x64xf32>
    %1 = arith.truncf %0 : vector<8x64xf32> to vector<8x64xbf16>
    %c0_1 = arith.constant 0 : index
    %c0_2 = arith.constant 0 : index
    %2 = vector.load %arg2[%c0_1, %c0_2] : memref<8x16xf32, #tpu.memory_space<vmem>>, vector<8x16xf32>
    %3 = arith.truncf %2 : vector<8x16xf32> to vector<8x16xbf16>
    %c0_3 = arith.constant 0 : index
    %c0_4 = arith.constant 0 : index
    %4 = vector.load %arg3[%c0_3, %c0_4] : memref<288x224xbf16, #tpu.memory_space<vmem>>, vector<64x224xbf16>
    %c64 = arith.constant 64 : index
    %c0_5 = arith.constant 0 : index
    %5 = vector.load %arg3[%c64, %c0_5] : memref<288x224xbf16, #tpu.memory_space<vmem>>, vector<224x192xbf16>
    %c0_6 = arith.constant 0 : index
    %c0_7 = arith.constant 0 : index
    %6 = vector.load %arg4[%c0_6, %c0_7] : memref<304x32xbf16, #tpu.memory_space<vmem>>, vector<192x32xbf16>
    %c192 = arith.constant 192 : index
    %c0_8 = arith.constant 0 : index
    %7 = vector.load %arg4[%c192, %c0_8] : memref<304x32xbf16, #tpu.memory_space<vmem>>, vector<16x32xbf16>
    %c208 = arith.constant 208 : index
    %c0_9 = arith.constant 0 : index
    %8 = vector.load %arg4[%c208, %c0_9] : memref<304x32xbf16, #tpu.memory_space<vmem>>, vector<32x32xbf16>
    %c240 = arith.constant 240 : index
    %c0_10 = arith.constant 0 : index
    %9 = vector.load %arg4[%c240, %c0_10] : memref<304x32xbf16, #tpu.memory_space<vmem>>, vector<32x32xbf16>
    %c272 = arith.constant 272 : index
    %c0_11 = arith.constant 0 : index
    %10 = vector.load %arg4[%c272, %c0_11] : memref<304x32xbf16, #tpu.memory_space<vmem>>, vector<32x32xbf16>
    %c0_12 = arith.constant 0 : index
    %c0_13 = arith.constant 0 : index
    %11 = vector.load %arg5[%c0_12, %c0_13] : memref<8x224xf32, #tpu.memory_space<vmem>>, vector<1x224xf32>
    %c1 = arith.constant 1 : index
    %c0_14 = arith.constant 0 : index
    %12 = vector.load %arg5[%c1, %c0_14] : memref<8x224xf32, #tpu.memory_space<vmem>>, vector<1x192xf32>
    %c2 = arith.constant 2 : index
    %c0_15 = arith.constant 0 : index
    %13 = vector.load %arg5[%c2, %c0_15] : memref<8x224xf32, #tpu.memory_space<vmem>>, vector<1x32xf32>
    %c3 = arith.constant 3 : index
    %c0_16 = arith.constant 0 : index
    %14 = vector.load %arg5[%c3, %c0_16] : memref<8x224xf32, #tpu.memory_space<vmem>>, vector<1x32xf32>
    %c4 = arith.constant 4 : index
    %c0_17 = arith.constant 0 : index
    %15 = vector.load %arg5[%c4, %c0_17] : memref<8x224xf32, #tpu.memory_space<vmem>>, vector<1x32xf32>
    %c5 = arith.constant 5 : index
    %c0_18 = arith.constant 0 : index
    %16 = vector.load %arg5[%c5, %c0_18] : memref<8x224xf32, #tpu.memory_space<vmem>>, vector<1x32xf32>
    %cst = arith.constant dense<0.000000e+00> : vector<8x224xf32>
    %17 = tpu.matmul %1, %4, %cst {dimension_numbers = #tpu.dot_dimension_numbers<[1], [0], [0], [1], [0, 0, 1, 1], [], []>} : vector<8x64xbf16>, vector<64x224xbf16>, vector<8x224xf32> -> vector<8x224xf32>
    %18 = vector.broadcast %11 : vector<1x224xf32> to vector<8x224xf32>
    %19 = arith.addf %17, %18 : vector<8x224xf32>
    %cst_19 = arith.constant 0.000000e+00 : f32
    %20 = vector.broadcast %cst_19 : f32 to vector<8x224xf32>
    %21 = arith.maximumf %19, %20 : vector<8x224xf32>
    %22 = arith.truncf %21 : vector<8x224xf32> to vector<8x224xbf16>
    %cst_20 = arith.constant dense<0.000000e+00> : vector<8x192xf32>
    %23 = tpu.matmul %22, %5, %cst_20 {dimension_numbers = #tpu.dot_dimension_numbers<[1], [0], [0], [1], [0, 0, 1, 1], [], []>} : vector<8x224xbf16>, vector<224x192xbf16>, vector<8x192xf32> -> vector<8x192xf32>
    %24 = vector.broadcast %12 : vector<1x192xf32> to vector<8x192xf32>
    %25 = arith.addf %23, %24 : vector<8x192xf32>
    %cst_21 = arith.constant 0.000000e+00 : f32
    %26 = vector.broadcast %cst_21 : f32 to vector<8x192xf32>
    %27 = arith.maximumf %25, %26 : vector<8x192xf32>
    %28 = arith.truncf %27 : vector<8x192xf32> to vector<8x192xbf16>
    %cst_22 = arith.constant dense<0.000000e+00> : vector<8x32xf32>
    %29 = tpu.matmul %28, %6, %cst_22 {dimension_numbers = #tpu.dot_dimension_numbers<[1], [0], [0], [1], [0, 0, 1, 1], [], []>} : vector<8x192xbf16>, vector<192x32xbf16>, vector<8x32xf32> -> vector<8x32xf32>
    %cst_23 = arith.constant dense<0.000000e+00> : vector<8x32xf32>
    %30 = tpu.matmul %3, %7, %cst_23 {dimension_numbers = #tpu.dot_dimension_numbers<[1], [0], [0], [1], [0, 0, 1, 1], [], []>} : vector<8x16xbf16>, vector<16x32xbf16>, vector<8x32xf32> -> vector<8x32xf32>
    %31 = arith.addf %29, %30 : vector<8x32xf32>
    %32 = vector.broadcast %13 : vector<1x32xf32> to vector<8x32xf32>
    %33 = arith.addf %31, %32 : vector<8x32xf32>
    %cst_24 = arith.constant 0.000000e+00 : f32
    %34 = vector.broadcast %cst_24 : f32 to vector<8x32xf32>
    %35 = arith.maximumf %33, %34 : vector<8x32xf32>
    %36 = arith.truncf %35 : vector<8x32xf32> to vector<8x32xbf16>
    %cst_25 = arith.constant dense<0.000000e+00> : vector<8x32xf32>
    %37 = tpu.matmul %36, %8, %cst_25 {dimension_numbers = #tpu.dot_dimension_numbers<[1], [0], [0], [1], [0, 0, 1, 1], [], []>} : vector<8x32xbf16>, vector<32x32xbf16>, vector<8x32xf32> -> vector<8x32xf32>
    %38 = vector.broadcast %14 : vector<1x32xf32> to vector<8x32xf32>
    %39 = arith.addf %37, %38 : vector<8x32xf32>
    %cst_26 = arith.constant 0.000000e+00 : f32
    %40 = vector.broadcast %cst_26 : f32 to vector<8x32xf32>
    %41 = arith.maximumf %39, %40 : vector<8x32xf32>
    %42 = arith.truncf %41 : vector<8x32xf32> to vector<8x32xbf16>
    %cst_27 = arith.constant dense<0.000000e+00> : vector<8x32xf32>
    %43 = tpu.matmul %42, %9, %cst_27 {dimension_numbers = #tpu.dot_dimension_numbers<[1], [0], [0], [1], [0, 0, 1, 1], [], []>} : vector<8x32xbf16>, vector<32x32xbf16>, vector<8x32xf32> -> vector<8x32xf32>
    %44 = vector.broadcast %15 : vector<1x32xf32> to vector<8x32xf32>
    %45 = arith.addf %43, %44 : vector<8x32xf32>
    %cst_28 = arith.constant 0.000000e+00 : f32
    %46 = vector.broadcast %cst_28 : f32 to vector<8x32xf32>
    %47 = arith.maximumf %45, %46 : vector<8x32xf32>
    %48 = arith.truncf %47 : vector<8x32xf32> to vector<8x32xbf16>
    %cst_29 = arith.constant dense<0.000000e+00> : vector<8x32xf32>
    %49 = tpu.matmul %48, %10, %cst_29 {dimension_numbers = #tpu.dot_dimension_numbers<[1], [0], [0], [1], [0, 0, 1, 1], [], []>} : vector<8x32xbf16>, vector<32x32xbf16>, vector<8x32xf32> -> vector<8x32xf32>
    %50 = vector.broadcast %16 : vector<1x32xf32> to vector<8x32xf32>
    %51 = arith.addf %49, %50 : vector<8x32xf32>
    %52 = vector.extract_strided_slice %51 {offsets = [0, 0], sizes = [8, 2], strides = [1, 1]} : vector<8x32xf32> to vector<8x2xf32>
    %cst_30 = arith.constant 2.000000e+01 : f32
    %53 = vector.broadcast %cst_30 : f32 to vector<8x2xf32>
    %54 = arith.cmpf ogt, %52, %53 : vector<8x2xf32>
    %cst_31 = arith.constant 2.000000e+01 : f32
    %55 = vector.broadcast %cst_31 : f32 to vector<8x2xf32>
    %56 = arith.minimumf %52, %55 : vector<8x2xf32>
    %57 = math.exp %56 : vector<8x2xf32>
    %58 = math.log1p %57 : vector<8x2xf32>
    %59 = arith.select %54, %52, %58 : vector<8x2xi1>, vector<8x2xf32>
    %c0_32 = arith.constant 0 : index
    %c0_33 = arith.constant 0 : index
    %60 = vector.load %arg6[%c0_32, %c0_33] : memref<8x2xf32, #tpu.memory_space<vmem>>, vector<8x2xf32>
    tpu.vector_store %arg6[%c0_32, %c0_33], %59 {strides = array<i32>} : memref<8x2xf32, #tpu.memory_space<vmem>>, vector<8x2xf32>,
    return
  }
  func.func @transform_0(%arg0: i32) -> (i32, i32) {
    %c0_i32 = arith.constant 0 : i32
    %c0_i32_0 = arith.constant 0 : i32
    return %arg0, %c0_i32 : i32, i32
  }
  func.func @transform_1(%arg0: i32) -> (i32, i32) {
    %c0_i32 = arith.constant 0 : i32
    %c0_i32_0 = arith.constant 0 : i32
    return %arg0, %c0_i32 : i32, i32
  }
  func.func @transform_2(%arg0: i32) -> (i32, i32) {
    %c0_i32 = arith.constant 0 : i32
    %c0_i32_0 = arith.constant 0 : i32
    %c0_i32_1 = arith.constant 0 : i32
    return %c0_i32, %c0_i32_0 : i32, i32
  }
  func.func @transform_3(%arg0: i32) -> (i32, i32) {
    %c0_i32 = arith.constant 0 : i32
    %c0_i32_0 = arith.constant 0 : i32
    %c0_i32_1 = arith.constant 0 : i32
    return %c0_i32, %c0_i32_0 : i32, i32
  }
  func.func @transform_4(%arg0: i32) -> (i32, i32) {
    %c0_i32 = arith.constant 0 : i32
    %c0_i32_0 = arith.constant 0 : i32
    %c0_i32_1 = arith.constant 0 : i32
    return %c0_i32, %c0_i32_0 : i32, i32
  }
  func.func @transform_5(%arg0: i32) -> (i32, i32) {
    %c0_i32 = arith.constant 0 : i32
    %c0_i32_0 = arith.constant 0 : i32
    return %arg0, %c0_i32 : i32, i32
  }
}

</mosaic_0001>

<llo_original>
// kernel: tpif_cnn_forward.1
$region0: #{tpif_cnn_forward.1}
  #allocation0 [shape = 'u32[]', space=smem, size = 0x4, offset = 0x4, fixed_abs, tag = 'smem constant byte address 0x4 - core index']
  #allocation1 [shape = 'u32[144,128]{1,0:T(1,128)}', space=vmem, size = 0x12000, scoped, tag = 'internal scratch']
  %s0 = inlined_call_operand.vmem [shape: f32[8,64], index: 0, kind: input, shape index: {}]
  %s1 = inlined_call_operand.vmem [shape: f32[8,16], index: 1, kind: input, shape index: {}]
  %s2 = inlined_call_operand.vmem [shape: bf16[288,224], index: 2, kind: input, shape index: {}]
  %s3 = inlined_call_operand.vmem [shape: bf16[304,32], index: 3, kind: input, shape index: {}]
  %s4 = inlined_call_operand.vmem [shape: f32[8,224], index: 4, kind: input, shape index: {}]
  %s5 = inlined_call_operand.vmem [shape: f32[8,2], index: 5, kind: output, shape index: {}]
  %s6 = sld [smem:[#allocation0]]
  $region30: #{tpif_cnn_forward.1} parent=0
    _
  %s8 = ssub.s32 1, %s6
  %s9 = scalar_select 0, %s8, %s6
  // Predicated region
  $region2: #{tpif_cnn_forward.1} parent=0 // pred_check
    _
  $region3: #{tpif_cnn_forward.1} parent=0 // pred_check_branch
    %11 = sbr.rel (0) target = $region5
  $region4: #{tpif_cnn_forward.1} parent=0 // pred_region
    _
  $region5: #{tpif_cnn_forward.1} parent=0 // pred_fallthru
    _
  // Predicated region
  $region6: #{tpif_cnn_forward.1} parent=0 // pred_check
    _
  $region7: #{tpif_cnn_forward.1} parent=0 // pred_check_branch
    %13 = sbr.rel (0) target = $region9
  $region8: #{tpif_cnn_forward.1} parent=0 // pred_region
    _
  $region9: #{tpif_cnn_forward.1} parent=0 // pred_fallthru
    _
  // Predicated region
  $region10: #{tpif_cnn_forward.1} parent=0 // pred_check
    _
  $region11: #{tpif_cnn_forward.1} parent=0 // pred_check_branch
    %15 = sbr.rel (0) target = $region13
  $region12: #{tpif_cnn_forward.1} parent=0 // pred_region
    _
  $region13: #{tpif_cnn_forward.1} parent=0 // pred_fallthru
    _
  // Predicated region
  $region14: #{tpif_cnn_forward.1} parent=0 // pred_check
    _
  $region15: #{tpif_cnn_forward.1} parent=0 // pred_check_branch
    %17 = sbr.rel (0) target = $region17
  $region16: #{tpif_cnn_forward.1} parent=0 // pred_region
    _
  $region17: #{tpif_cnn_forward.1} parent=0 // pred_fallthru
    _
  // Predicated region
  $region18: #{tpif_cnn_forward.1} parent=0 // pred_check
    _
  $region19: #{tpif_cnn_forward.1} parent=0 // pred_check_branch
    %19 = sbr.rel (0) target = $region21
  $region20: #{tpif_cnn_forward.1} parent=0 // pred_region
    _
  $region21: #{tpif_cnn_forward.1} parent=0 // pred_fallthru
    _
  %v21 = vld [vmem:[%s0] sm:$0xff]
  %v22 = vpack.c.bf16 %v21, %v21
  %v23 = vld [vmem:[%s1] sm:$0xff]
  %v24 = vpack.c.bf16 %v23, %v23
  %v25 = vld [vmem:[%s2] sm:$0xff]
  %v26 = vld [vmem:[%s2 + $0x8] sm:$0xff]
  %v27 = vld [vmem:[%s2 + $0x10] sm:$0xff]
  %v28 = vld [vmem:[%s2 + $0x18] sm:$0xff]
  %v29 = vld [vmem:[%s2 + $0x20] sm:$0xff]
  %v30 = vld [vmem:[%s2 + $0x28] sm:$0xff]
  %v31 = vld [vmem:[%s2 + $0x30] sm:$0xff]
  %v32 = vld [vmem:[%s2 + $0x38] sm:$0xff]
  %v33 = vld [vmem:[%s2 + $0x40] sm:$0xff]
  %v34 = vld [vmem:[%s2 + $0x48] sm:$0xff]
  %v35 = vld [vmem:[%s2 + $0x50] sm:$0xff]
  %v36 = vld [vmem:[%s2 + $0x58] sm:$0xff]
  %v37 = vld [vmem:[%s2 + $0x60] sm:$0xff]
  %v38 = vld [vmem:[%s2 + $0x68] sm:$0xff]
  %v39 = vld [vmem:[%s2 + $0x70] sm:$0xff]
  %v40 = vld [vmem:[%s2 + $0x78] sm:$0xff]
  %v41 = vld [vmem:[%s2 + $0x80] sm:$0xff]
  %v42 = vld [vmem:[%s2 + $0x88] sm:$0xff]
  %v43 = vld [vmem:[%s2 + $0x90] sm:$0xff]
  %v44 = vld [vmem:[%s2 + $0x98] sm:$0xff]
  %v45 = vld [vmem:[%s2 + $0xa0] sm:$0xff]
  %v46 = vld [vmem:[%s2 + $0xa8] sm:$0xff]
  %v47 = vld [vmem:[%s2 + $0xb0] sm:$0xff]
  %v48 = vld [vmem:[%s2 + $0xb8] sm:$0xff]
  %v49 = vld [vmem:[%s2 + $0xc0] sm:$0xff]
  %v50 = vld [vmem:[%s2 + $0xc8] sm:$0xff]
  %v51 = vld [vmem:[%s2 + $0xd0] sm:$0xff]
  %v52 = vld [vmem:[%s2 + $0xd8] sm:$0xff]
  %v53 = vld [vmem:[%s2 + $0xe0] sm:$0xff]
  %v54 = vld [vmem:[%s2 + $0xe8] sm:$0xff]
  %v55 = vld [vmem:[%s2 + $0xf0] sm:$0xff]
  %v56 = vld [vmem:[%s2 + $0xf8] sm:$0xff]
  %v57 = vld [vmem:[%s2 + $0x100] sm:$0xff]
  %v58 = vld [vmem:[%s2 + $0x108] sm:$0xff]
  %v59 = vld [vmem:[%s2 + $0x110] sm:$0xff]
  %v60 = vld [vmem:[%s2 + $0x118] sm:$0xff]
  %v61 = vld [vmem:[%s3] sm:$0xf]
  %v62 = vld [vmem:[%s3 + $0x4] sm:$0xf]
  %v63 = vld [vmem:[%s3 + $0x8] sm:$0xf]
  %v64 = vld [vmem:[%s3 + $0xc] sm:$0xf]
  %v65 = vld [vmem:[%s3 + $0x10] sm:$0xf]
  %v66 = vld [vmem:[%s3 + $0x14] sm:$0xf]
  %v67 = vld [vmem:[%s3 + $0x18] sm:$0xf]
  %v68 = vld [vmem:[%s3 + $0x1c] sm:$0xf]
  %v69 = vld [vmem:[%s3 + $0x20] sm:$0xf]
  %v70 = vld [vmem:[%s3 + $0x24] sm:$0xf]
  %v71 = vld [vmem:[%s3 + $0x28] sm:$0xf]
  %v72 = vld [vmem:[%s3 + $0x2c] sm:$0xf]
  %v73 = vld [vmem:[%s3 + $0x30] sm:$0xf]
  %v74 = vld [vmem:[%s3 + $0x34] sm:$0xf]
  %v75 = vld [vmem:[%s3 + $0x38] sm:$0xf]
  %v76 = vld [vmem:[%s3 + $0x3c] sm:$0xf]
  %v77 = vld [vmem:[%s3 + $0x40] sm:$0xf]
  %v78 = vld [vmem:[%s3 + $0x44] sm:$0xf]
  %v79 = vld [vmem:[%s3 + $0x48] sm:$0xf]
  %v80 = vld [vmem:[%s3 + $0x4c] sm:$0xf]
  %v81 = vld [vmem:[%s3 + $0x50] sm:$0xf]
  %v82 = vld [vmem:[%s3 + $0x54] sm:$0xf]
  %v83 = vld [vmem:[%s3 + $0x58] sm:$0xf]
  %v84 = vld [vmem:[%s3 + $0x5c] sm:$0xf]
  %v85 = vld [vmem:[%s3 + $0x60] sm:$0xf]
  %v86 = vld [vmem:[%s3 + $0x64] sm:$0xf]
  %v87 = vld [vmem:[%s3 + $0x68] sm:$0xf]
  %v88 = vld [vmem:[%s3 + $0x6c] sm:$0xf]
  %v89 = vld [vmem:[%s3 + $0x70] sm:$0xf]
  %v90 = vld [vmem:[%s3 + $0x74] sm:$0xf]
  %v91 = vld [vmem:[%s3 + $0x78] sm:$0xf]
  %v92 = vld [vmem:[%s3 + $0x7c] sm:$0xf]
  %v93 = vld [vmem:[%s3 + $0x80] sm:$0xf]
  %v94 = vld [vmem:[%s3 + $0x84] sm:$0xf]
  %v95 = vld [vmem:[%s3 + $0x88] sm:$0xf]
  %v96 = vld [vmem:[%s3 + $0x8c] sm:$0xf]
  %v97 = vld [vmem:[%s3 + $0x90] sm:$0xf]
  %v98 = vld [vmem:[%s3 + $0x94] sm:$0xf]
  %v99 = vld [vmem:[%s4] ss:$8 sm:$0x3]
  %s100 = scalar_lea.vmem %s4, 1
  %v101 = vld [vmem:[%s100] ss:$8 sm:$0x3]
  %v102 = vld [vmem:[%s4 + $0x2] ss:$0 sm:$0xff]
  %v103 = vld [vmem:[%s4 + $0x3] ss:$0 sm:$0xff]
  %v104 = vld [vmem:[%s4 + $0x4] ss:$0 sm:$0xff]
  %v105 = vld [vmem:[%s4 + $0x5] ss:$0 sm:$0xff]
  %v107 = vlaneseq
  %v108 = vshrl.u32 %v107, 7
  %v109 = vsub.s32 0, %v108
  %v110 = vrot.slane %v99, %v109
  %v111 = vlaneseq
  %v112 = vshrl.u32 %v111, 7
  %v113 = vsub.s32 1, %v112
  %v114 = vrot.slane %v99, %v113
  %v125 = vunpack.c.l.b16 %v25
  %v126 = vunpack.c.h.b16 %v25
  %v127 = vunpack.c.l.b16 %v26
  %v128 = vunpack.c.h.b16 %v26
  %v129 = vunpack.c.l.b16 %v27
  %v130 = vunpack.c.h.b16 %v27
  %v131 = vunpack.c.l.b16 %v28
  %v132 = vunpack.c.h.b16 %v28
  %v133 = vunpack.c.l.b16 %v29
  %v134 = vunpack.c.h.b16 %v29
  %v135 = vunpack.c.l.b16 %v30
  %v136 = vunpack.c.h.b16 %v30
  %v137 = vunpack.c.l.b16 %v31
  %v138 = vunpack.c.h.b16 %v31
  %v139 = vunpack.c.l.b16 %v32
  %v140 = vunpack.c.h.b16 %v32
  %v141 = vpack.c.b16 %v127, %v125
  %v142 = vpack.c.b16 %v128, %v126
  %v143 = vpack.c.b16 %v131, %v129
  %v144 = vpack.c.b16 %v132, %v130
  %v145 = vpack.c.b16 %v135, %v133
  %v146 = vpack.c.b16 %v136, %v134
  %v147 = vpack.c.b16 %v139, %v137
  %v148 = vpack.c.b16 %v140, %v138
  %vm157 = vcmask 523264
  %v159 = vsel %vm157, %v22, 0
  %161 = vmatprep.subr.bf16.mxu0 %v142
  %162 = vmatpush1.bf16.msra.mxu0 %v141
  %163 = vmatprep.subr.bf16.mxu0 %v144
  %164 = vmatpush1.bf16.msra.mxu0 %v143
  %165 = vmatprep.subr.bf16.mxu0 %v146
  %166 = vmatpush1.bf16.msra.mxu0 %v145
  %167 = vmatprep.subr.bf16.mxu0 %v148
  %168 = vmatpush1.bf16.msra.mxu0 %v147
  %169 = vmatprep.subr.bf16.mxu0 0
  %170 = vmatpush1.bf16.msra.mxu0 0
  %171 = vmatprep.subr.bf16.mxu0 0
  %172 = vmatpush1.bf16.msra.mxu0 0
  %173 = vmatprep.subr.bf16.mxu0 0
  %174 = vmatpush1.bf16.msra.mxu0 0
  %175 = vmatprep.subr.bf16.mxu0 0
  %176 = vmatpush1.bf16.msra.mxu0 0
  %177 = vmatprep.subr.bf16.mxu0 0
  %178 = vmatpush1.bf16.msra.mxu0 0
  %179 = vmatprep.subr.bf16.mxu0 0
  %180 = vmatpush1.bf16.msra.mxu0 0
  %181 = vmatprep.subr.bf16.mxu0 0
  %182 = vmatpush1.bf16.msra.mxu0 0
  %183 = vmatprep.subr.bf16.mxu0 0
  %184 = vmatpush1.bf16.msra.mxu0 0
  %185 = vmatprep.subr.bf16.mxu0 0
  %186 = vmatpush1.bf16.msra.mxu0 0
  %187 = vmatprep.subr.bf16.mxu0 0
  %188 = vmatpush1.bf16.msra.mxu0 0
  %189 = vmatprep.subr.bf16.mxu0 0
  %190 = vmatpush1.bf16.msra.mxu0 0
  %191 = vmatprep.subr.bf16.mxu0 0
  %192 = vmatpush1.bf16.msra.mxu0 0
  %193 = vmatprep.mubr.bf16.mxu0 0
  %194 = vmatmul.mubr.bf16.gmra.mrb[0].mxu0 %v159
  %v195 = vpop.f32.mrb[0].mxu0
  %v196 = vadd.f32 %v110, %v195
  %v197 = vpop.f32.mrb[0].mxu0
  %v198 = vadd.f32 %v114, %v197
  %v199 = vpop.f32.mrb[0].mxu0
  %v200 = vpop.f32.mrb[0].mxu0
  %201 = vdwg.mxu0
  %v202 = vmax.f32 %v196, 0.0
  %v203 = vmax.f32 %v198, 0.0
  %v204 = vpack.c.bf16 %v202, %v202
  %v205 = vpack.c.bf16 %v203, %v203
  %v207 = vlaneseq
  %v208 = vshrl.u32 %v207, 7
  %v209 = vsub.s32 0, %v208
  %v210 = vrot.slane %v101, %v209
  %v211 = vlaneseq
  %v212 = vshrl.u32 %v211, 7
  %v213 = vsub.s32 1, %v212
  %v214 = vrot.slane %v101, %v213
  %v245 = vunpack.c.l.b16 %v33
  %v246 = vunpack.c.h.b16 %v33
  %v247 = vunpack.c.l.b16 %v34
  %v248 = vunpack.c.h.b16 %v34
  %v249 = vunpack.c.l.b16 %v35
  %v250 = vunpack.c.h.b16 %v35
  %v251 = vunpack.c.l.b16 %v36
  %v252 = vunpack.c.h.b16 %v36
  %v253 = vunpack.c.l.b16 %v37
  %v254 = vunpack.c.h.b16 %v37
  %v255 = vunpack.c.l.b16 %v38
  %v256 = vunpack.c.h.b16 %v38
  %v257 = vunpack.c.l.b16 %v39
  %v258 = vunpack.c.h.b16 %v39
  %v259 = vunpack.c.l.b16 %v40
  %v260 = vunpack.c.h.b16 %v40
  %v261 = vunpack.c.l.b16 %v41
  %v262 = vunpack.c.h.b16 %v41
  %v263 = vunpack.c.l.b16 %v42
  %v264 = vunpack.c.h.b16 %v42
  %v265 = vunpack.c.l.b16 %v43
  %v266 = vunpack.c.h.b16 %v43
  %v267 = vunpack.c.l.b16 %v44
  %v268 = vunpack.c.h.b16 %v44
  %v269 = vunpack.c.l.b16 %v45
  %v270 = vunpack.c.h.b16 %v45
  %v271 = vunpack.c.l.b16 %v46
  %v272 = vunpack.c.h.b16 %v46
  %v273 = vunpack.c.l.b16 %v47
  %v274 = vunpack.c.h.b16 %v47
  %v275 = vunpack.c.l.b16 %v48
  %v276 = vunpack.c.h.b16 %v48
  %v277 = vunpack.c.l.b16 %v49
  %v278 = vunpack.c.h.b16 %v49
  %v279 = vunpack.c.l.b16 %v50
  %v280 = vunpack.c.h.b16 %v50
  %v281 = vunpack.c.l.b16 %v51
  %v282 = vunpack.c.h.b16 %v51
  %v283 = vunpack.c.l.b16 %v52
  %v284 = vunpack.c.h.b16 %v52
  %v285 = vunpack.c.l.b16 %v53
  %v286 = vunpack.c.h.b16 %v53
  %v287 = vunpack.c.l.b16 %v54
  %v288 = vunpack.c.h.b16 %v54
  %v289 = vunpack.c.l.b16 %v55
  %v290 = vunpack.c.h.b16 %v55
  %v291 = vunpack.c.l.b16 %v56
  %v292 = vunpack.c.h.b16 %v56
  %v293 = vunpack.c.l.b16 %v57
  %v294 = vunpack.c.h.b16 %v57
  %v295 = vunpack.c.l.b16 %v58
  %v296 = vunpack.c.h.b16 %v58
  %v297 = vunpack.c.l.b16 %v59
  %v298 = vunpack.c.h.b16 %v59
  %v299 = vunpack.c.l.b16 %v60
  %v300 = vunpack.c.h.b16 %v60
  %v301 = vpack.c.b16 %v247, %v245
  %v302 = vpack.c.b16 %v248, %v246
  %v303 = vpack.c.b16 %v251, %v249
  %v304 = vpack.c.b16 %v252, %v250
  %v305 = vpack.c.b16 %v255, %v253
  %v306 = vpack.c.b16 %v256, %v254
  %v307 = vpack.c.b16 %v259, %v257
  %v308 = vpack.c.b16 %v260, %v258
  %v309 = vpack.c.b16 %v263, %v261
  %v310 = vpack.c.b16 %v264, %v262
  %v311 = vpack.c.b16 %v267, %v265
  %v312 = vpack.c.b16 %v268, %v266
  %v313 = vpack.c.b16 %v271, %v269
  %v314 = vpack.c.b16 %v272, %v270
  %v315 = vpack.c.b16 %v275, %v273
  %v316 = vpack.c.b16 %v276, %v274
  %v317 = vpack.c.b16 %v279, %v277
  %v318 = vpack.c.b16 %v280, %v278
  %v319 = vpack.c.b16 %v283, %v281
  %v320 = vpack.c.b16 %v284, %v282
  %v321 = vpack.c.b16 %v287, %v285
  %v322 = vpack.c.b16 %v288, %v286
  %v323 = vpack.c.b16 %v291, %v289
  %v324 = vpack.c.b16 %v292, %v290
  %v325 = vpack.c.b16 %v295, %v293
  %v326 = vpack.c.b16 %v296, %v294
  %v327 = vpack.c.b16 %v299, %v297
  %v328 = vpack.c.b16 %v300, %v298
  %vm357 = vcmask 785408
  %v359 = vsel %vm357, %v205, 0
  %361 = vmatprep.subr.bf16.mxu0 %v302
  %362 = vmatpush1.bf16.msra.mxu0 %v301
  %363 = vmatprep.subr.bf16.mxu0 %v304
  %364 = vmatpush1.bf16.msra.mxu0 %v303
  %365 = vmatprep.subr.bf16.mxu0 %v306
  %366 = vmatpush1.bf16.msra.mxu0 %v305
  %367 = vmatprep.subr.bf16.mxu0 %v308
  %368 = vmatpush1.bf16.msra.mxu0 %v307
  %369 = vmatprep.subr.bf16.mxu0 %v310
  %370 = vmatpush1.bf16.msra.mxu0 %v309
  %371 = vmatprep.subr.bf16.mxu0 %v312
  %372 = vmatpush1.bf16.msra.mxu0 %v311
  %373 = vmatprep.subr.bf16.mxu0 %v314
  %374 = vmatpush1.bf16.msra.mxu0 %v313
  %375 = vmatprep.subr.bf16.mxu0 %v316
  %376 = vmatpush1.bf16.msra.mxu0 %v315
  %377 = vmatprep.subr.bf16.mxu0 %v318
  %378 = vmatpush1.bf16.msra.mxu0 %v317
  %379 = vmatprep.subr.bf16.mxu0 %v320
  %380 = vmatpush1.bf16.msra.mxu0 %v319
  %381 = vmatprep.subr.bf16.mxu0 %v322
  %382 = vmatpush1.bf16.msra.mxu0 %v321
  %383 = vmatprep.subr.bf16.mxu0 %v324
  %384 = vmatpush1.bf16.msra.mxu0 %v323
  %385 = vmatprep.subr.bf16.mxu0 %v326
  %386 = vmatpush1.bf16.msra.mxu0 %v325
  %387 = vmatprep.subr.bf16.mxu0 %v328
  %388 = vmatpush1.bf16.msra.mxu0 %v327
  %389 = vmatprep.subr.bf16.mxu0 0
  %390 = vmatpush1.bf16.msra.mxu0 0
  %391 = vmatprep.subr.bf16.mxu0 0
  %392 = vmatpush1.bf16.msra.mxu0 0
  %393 = vmatprep.mubr.bf16.mxu0 %v359
  %394 = vmatmul.mubr.bf16.gmra.mrb[0].mxu0 %v204
  %v395 = vpop.f32.mrb[0].mxu0
  %v396 = vadd.f32 %v210, %v395
  %v397 = vpop.f32.mrb[0].mxu0
  %v398 = vadd.f32 %v214, %v397
  %v399 = vpop.f32.mrb[0].mxu0
  %v400 = vpop.f32.mrb[0].mxu0
  %401 = vdwg.mxu0
  %v402 = vmax.f32 %v396, 0.0
  %v403 = vmax.f32 %v398, 0.0
  %v404 = vpack.c.bf16 %v402, %v402
  %v405 = vpack.c.bf16 %v403, %v403
  %v408 = vunpack.c.l.b16 %v85
  %v409 = vunpack.c.l.b16 %v86
  %v410 = vpack.c.b16 %v409, %v408
  %vm412 = vcmask 130048
  %v414 = vsel %vm412, %v24, 0
  %416 = vmatprep.subr.bf16.mxu0 0
  %417 = vmatpush1.bf16.msra.mxu0 %v410
  %418 = vmatprep.subr.bf16.mxu0 0
  %419 = vmatpush1.bf16.msra.mxu0 0
  %420 = vmatprep.subr.bf16.mxu0 0
  %421 = vmatpush1.bf16.msra.mxu0 0
  %422 = vmatprep.subr.bf16.mxu0 0
  %423 = vmatpush1.bf16.msra.mxu0 0
  %424 = vmatprep.subr.bf16.mxu0 0
  %425 = vmatpush1.bf16.msra.mxu0 0
  %426 = vmatprep.subr.bf16.mxu0 0
  %427 = vmatpush1.bf16.msra.mxu0 0
  %428 = vmatprep.subr.bf16.mxu0 0
  %429 = vmatpush1.bf16.msra.mxu0 0
  %430 = vmatprep.subr.bf16.mxu0 0
  %431 = vmatpush1.bf16.msra.mxu0 0
  %432 = vmatprep.subr.bf16.mxu0 0
  %433 = vmatpush1.bf16.msra.mxu0 0
  %434 = vmatprep.subr.bf16.mxu0 0
  %435 = vmatpush1.bf16.msra.mxu0 0
  %436 = vmatprep.subr.bf16.mxu0 0
  %437 = vmatpush1.bf16.msra.mxu0 0
  %438 = vmatprep.subr.bf16.mxu0 0
  %439 = vmatpush1.bf16.msra.mxu0 0
  %440 = vmatprep.subr.bf16.mxu0 0
  %441 = vmatpush1.bf16.msra.mxu0 0
  %442 = vmatprep.subr.bf16.mxu0 0
  %443 = vmatpush1.bf16.msra.mxu0 0
  %444 = vmatprep.subr.bf16.mxu0 0
  %445 = vmatpush1.bf16.msra.mxu0 0
  %446 = vmatprep.subr.bf16.mxu0 0
  %447 = vmatpush1.bf16.msra.mxu0 0
  %448 = vmatprep.mubr.bf16.mxu0 0
  %449 = vmatmul.mubr.bf16.gmra.mrb[0].mxu0 %v414
  %v450 = vpop.f32.mrb[0].mxu0
  %v451 = vadd.f32 0.0, %v450
  %v452 = vpop.f32.mrb[0].mxu0
  %v453 = vpop.f32.mrb[0].mxu0
  %v454 = vpop.f32.mrb[0].mxu0
  %455 = vdwg.mxu0
  %v480 = vunpack.c.l.b16 %v61
  %v481 = vunpack.c.l.b16 %v62
  %v482 = vunpack.c.l.b16 %v63
  %v483 = vunpack.c.l.b16 %v64
  %v484 = vunpack.c.l.b16 %v65
  %v485 = vunpack.c.l.b16 %v66
  %v486 = vunpack.c.l.b16 %v67
  %v487 = vunpack.c.l.b16 %v68
  %v488 = vunpack.c.l.b16 %v69
  %v489 = vunpack.c.l.b16 %v70
  %v490 = vunpack.c.l.b16 %v71
  %v491 = vunpack.c.l.b16 %v72
  %v492 = vunpack.c.l.b16 %v73
  %v493 = vunpack.c.l.b16 %v74
  %v494 = vunpack.c.l.b16 %v75
  %v495 = vunpack.c.l.b16 %v76
  %v496 = vunpack.c.l.b16 %v77
  %v497 = vunpack.c.l.b16 %v78
  %v498 = vunpack.c.l.b16 %v79
  %v499 = vunpack.c.l.b16 %v80
  %v500 = vunpack.c.l.b16 %v81
  %v501 = vunpack.c.l.b16 %v82
  %v502 = vunpack.c.l.b16 %v83
  %v503 = vunpack.c.l.b16 %v84
  %v504 = vpack.c.b16 %v481, %v480
  %v505 = vpack.c.b16 %v483, %v482
  %v506 = vpack.c.b16 %v485, %v484
  %v507 = vpack.c.b16 %v487, %v486
  %v508 = vpack.c.b16 %v489, %v488
  %v509 = vpack.c.b16 %v491, %v490
  %v510 = vpack.c.b16 %v493, %v492
  %v511 = vpack.c.b16 %v495, %v494
  %v512 = vpack.c.b16 %v497, %v496
  %v513 = vpack.c.b16 %v499, %v498
  %v514 = vpack.c.b16 %v501, %v500
  %v515 = vpack.c.b16 %v503, %v502
  %v529 = vsel %vm157, %v405, 0
  %531 = vmatprep.subr.bf16.mxu0 0
  %532 = vmatpush1.bf16.msra.mxu0 %v504
  %533 = vmatprep.subr.bf16.mxu0 0
  %534 = vmatpush1.bf16.msra.mxu0 %v505
  %535 = vmatprep.subr.bf16.mxu0 0
  %536 = vmatpush1.bf16.msra.mxu0 %v506
  %537 = vmatprep.subr.bf16.mxu0 0
  %538 = vmatpush1.bf16.msra.mxu0 %v507
  %539 = vmatprep.subr.bf16.mxu0 0
  %540 = vmatpush1.bf16.msra.mxu0 %v508
  %541 = vmatprep.subr.bf16.mxu0 0
  %542 = vmatpush1.bf16.msra.mxu0 %v509
  %543 = vmatprep.subr.bf16.mxu0 0
  %544 = vmatpush1.bf16.msra.mxu0 %v510
  %545 = vmatprep.subr.bf16.mxu0 0
  %546 = vmatpush1.bf16.msra.mxu0 %v511
  %547 = vmatprep.subr.bf16.mxu0 0
  %548 = vmatpush1.bf16.msra.mxu0 %v512
  %549 = vmatprep.subr.bf16.mxu0 0
  %550 = vmatpush1.bf16.msra.mxu0 %v513
  %551 = vmatprep.subr.bf16.mxu0 0
  %552 = vmatpush1.bf16.msra.mxu0 %v514
  %553 = vmatprep.subr.bf16.mxu0 0
  %554 = vmatpush1.bf16.msra.mxu0 %v515
  %555 = vmatprep.subr.bf16.mxu0 0
  %556 = vmatpush1.bf16.msra.mxu0 0
  %557 = vmatprep.subr.bf16.mxu0 0
  %558 = vmatpush1.bf16.msra.mxu0 0
  %559 = vmatprep.subr.bf16.mxu0 0
  %560 = vmatpush1.bf16.msra.mxu0 0
  %561 = vmatprep.subr.bf16.mxu0 0
  %562 = vmatpush1.bf16.msra.mxu0 0
  %563 = vmatprep.mubr.bf16.mxu0 %v529
  %564 = vmatmul.mubr.bf16.gmra.mrb[0].mxu0 %v404
  %v565 = vpop.f32.mrb[0].mxu0
  %v566 = vadd.f32 %v451, %v565
  %v567 = vpop.f32.mrb[0].mxu0
  %v568 = vpop.f32.mrb[0].mxu0
  %v569 = vpop.f32.mrb[0].mxu0
  %570 = vdwg.mxu0
  %v571 = vadd.f32 %v566, %v102
  %v572 = vmax.f32 %v571, 0.0
  %v573 = vpack.c.bf16 %v572, %v572
  %v578 = vunpack.c.l.b16 %v87
  %v579 = vunpack.c.l.b16 %v88
  %v580 = vunpack.c.l.b16 %v89
  %v581 = vunpack.c.l.b16 %v90
  %v582 = vpack.c.b16 %v579, %v578
  %v583 = vpack.c.b16 %v581, %v580
  %vm586 = vcmask 261120
  %v588 = vsel %vm586, %v573, 0
  %590 = vmatprep.subr.bf16.mxu0 0
  %591 = vmatpush1.bf16.msra.mxu0 %v582
  %592 = vmatprep.subr.bf16.mxu0 0
  %593 = vmatpush1.bf16.msra.mxu0 %v583
  %594 = vmatprep.subr.bf16.mxu0 0
  %595 = vmatpush1.bf16.msra.mxu0 0
  %596 = vmatprep.subr.bf16.mxu0 0
  %597 = vmatpush1.bf16.msra.mxu0 0
  %598 = vmatprep.subr.bf16.mxu0 0
  %599 = vmatpush1.bf16.msra.mxu0 0
  %600 = vmatprep.subr.bf16.mxu0 0
  %601 = vmatpush1.bf16.msra.mxu0 0
  %602 = vmatprep.subr.bf16.mxu0 0
  %603 = vmatpush1.bf16.msra.mxu0 0
  %604 = vmatprep.subr.bf16.mxu0 0
  %605 = vmatpush1.bf16.msra.mxu0 0
  %606 = vmatprep.subr.bf16.mxu0 0
  %607 = vmatpush1.bf16.msra.mxu0 0
  %608 = vmatprep.subr.bf16.mxu0 0
  %609 = vmatpush1.bf16.msra.mxu0 0
  %610 = vmatprep.subr.bf16.mxu0 0
  %611 = vmatpush1.bf16.msra.mxu0 0
  %612 = vmatprep.subr.bf16.mxu0 0
  %613 = vmatpush1.bf16.msra.mxu0 0
  %614 = vmatprep.subr.bf16.mxu0 0
  %615 = vmatpush1.bf16.msra.mxu0 0
  %616 = vmatprep.subr.bf16.mxu0 0
  %617 = vmatpush1.bf16.msra.mxu0 0
  %618 = vmatprep.subr.bf16.mxu0 0
  %619 = vmatpush1.bf16.msra.mxu0 0
  %620 = vmatprep.subr.bf16.mxu0 0
  %621 = vmatpush1.bf16.msra.mxu0 0
  %622 = vmatprep.mubr.bf16.mxu0 0
  %623 = vmatmul.mubr.bf16.gmra.mrb[0].mxu0 %v588
  %v624 = vpop.f32.mrb[0].mxu0
  %v625 = vadd.f32 %v103, %v624
  %v626 = vpop.f32.mrb[0].mxu0
  %v627 = vpop.f32.mrb[0].mxu0
  %v628 = vpop.f32.mrb[0].mxu0
  %629 = vdwg.mxu0
  %v630 = vmax.f32 %v625, 0.0
  %v631 = vpack.c.bf16 %v630, %v630
  %v636 = vunpack.c.l.b16 %v91
  %v637 = vunpack.c.l.b16 %v92
  %v638 = vunpack.c.l.b16 %v93
  %v639 = vunpack.c.l.b16 %v94
  %v640 = vpack.c.b16 %v637, %v636
  %v641 = vpack.c.b16 %v639, %v638
  %v645 = vsel %vm586, %v631, 0
  %647 = vmatprep.subr.bf16.mxu0 0
  %648 = vmatpush1.bf16.msra.mxu0 %v640
  %649 = vmatprep.subr.bf16.mxu0 0
  %650 = vmatpush1.bf16.msra.mxu0 %v641
  %651 = vmatprep.subr.bf16.mxu0 0
  %652 = vmatpush1.bf16.msra.mxu0 0
  %653 = vmatprep.subr.bf16.mxu0 0
  %654 = vmatpush1.bf16.msra.mxu0 0
  %655 = vmatprep.subr.bf16.mxu0 0
  %656 = vmatpush1.bf16.msra.mxu0 0
  %657 = vmatprep.subr.bf16.mxu0 0
  %658 = vmatpush1.bf16.msra.mxu0 0
  %659 = vmatprep.subr.bf16.mxu0 0
  %660 = vmatpush1.bf16.msra.mxu0 0
  %661 = vmatprep.subr.bf16.mxu0 0
  %662 = vmatpush1.bf16.msra.mxu0 0
  %663 = vmatprep.subr.bf16.mxu0 0
  %664 = vmatpush1.bf16.msra.mxu0 0
  %665 = vmatprep.subr.bf16.mxu0 0
  %666 = vmatpush1.bf16.msra.mxu0 0
  %667 = vmatprep.subr.bf16.mxu0 0
  %668 = vmatpush1.bf16.msra.mxu0 0
  %669 = vmatprep.subr.bf16.mxu0 0
  %670 = vmatpush1.bf16.msra.mxu0 0
  %671 = vmatprep.subr.bf16.mxu0 0
  %672 = vmatpush1.bf16.msra.mxu0 0
  %673 = vmatprep.subr.bf16.mxu0 0
  %674 = vmatpush1.bf16.msra.mxu0 0
  %675 = vmatprep.subr.bf16.mxu0 0
  %676 = vmatpush1.bf16.msra.mxu0 0
  %677 = vmatprep.subr.bf16.mxu0 0
  %678 = vmatpush1.bf16.msra.mxu0 0
  %679 = vmatprep.mubr.bf16.mxu0 0
  %680 = vmatmul.mubr.bf16.gmra.mrb[0].mxu0 %v645
  %v681 = vpop.f32.mrb[0].mxu0
  %v682 = vadd.f32 %v104, %v681
  %v683 = vpop.f32.mrb[0].mxu0
  %v684 = vpop.f32.mrb[0].mxu0
  %v685 = vpop.f32.mrb[0].mxu0
  %686 = vdwg.mxu0
  %v687 = vmax.f32 %v682, 0.0
  %v688 = vpack.c.bf16 %v687, %v687
  %v693 = vunpack.c.l.b16 %v95
  %v694 = vunpack.c.l.b16 %v96
  %v695 = vunpack.c.l.b16 %v97
  %v696 = vunpack.c.l.b16 %v98
  %v697 = vpack.c.b16 %v694, %v693
  %v698 = vpack.c.b16 %v696, %v695
  %v702 = vsel %vm586, %v688, 0
  %704 = vmatprep.subr.bf16.mxu0 0
  %705 = vmatpush1.bf16.msra.mxu0 %v697
  %706 = vmatprep.subr.bf16.mxu0 0
  %707 = vmatpush1.bf16.msra.mxu0 %v698
  %708 = vmatprep.subr.bf16.mxu0 0
  %709 = vmatpush1.bf16.msra.mxu0 0
  %710 = vmatprep.subr.bf16.mxu0 0
  %711 = vmatpush1.bf16.msra.mxu0 0
  %712 = vmatprep.subr.bf16.mxu0 0
  %713 = vmatpush1.bf16.msra.mxu0 0
  %714 = vmatprep.subr.bf16.mxu0 0
  %715 = vmatpush1.bf16.msra.mxu0 0
  %716 = vmatprep.subr.bf16.mxu0 0
  %717 = vmatpush1.bf16.msra.mxu0 0
  %718 = vmatprep.subr.bf16.mxu0 0
  %719 = vmatpush1.bf16.msra.mxu0 0
  %720 = vmatprep.subr.bf16.mxu0 0
  %721 = vmatpush1.bf16.msra.mxu0 0
  %722 = vmatprep.subr.bf16.mxu0 0
  %723 = vmatpush1.bf16.msra.mxu0 0
  %724 = vmatprep.subr.bf16.mxu0 0
  %725 = vmatpush1.bf16.msra.mxu0 0
  %726 = vmatprep.subr.bf16.mxu0 0
  %727 = vmatpush1.bf16.msra.mxu0 0
  %728 = vmatprep.subr.bf16.mxu0 0
  %729 = vmatpush1.bf16.msra.mxu0 0
  %730 = vmatprep.subr.bf16.mxu0 0
  %731 = vmatpush1.bf16.msra.mxu0 0
  %732 = vmatprep.subr.bf16.mxu0 0
  %733 = vmatpush1.bf16.msra.mxu0 0
  %734 = vmatprep.subr.bf16.mxu0 0
  %735 = vmatpush1.bf16.msra.mxu0 0
  %736 = vmatprep.mubr.bf16.mxu0 0
  %737 = vmatmul.mubr.bf16.gmra.mrb[0].mxu0 %v702
  %v738 = vpop.f32.mrb[0].mxu0
  %v739 = vadd.f32 %v105, %v738
  %v740 = vpop.f32.mrb[0].mxu0
  %v741 = vpop.f32.mrb[0].mxu0
  %v742 = vpop.f32.mrb[0].mxu0
  %743 = vdwg.mxu0
  %vm744 = vcmp.gt.f32.partialorder %v739, 20.0
  %v745 = vmin.f32 %v739, 20.0
  %v746 = vmul.f32 %v745, 1.442695
  %v747 = vpow.pop %v746
  %v748 = vadd.f32 %v747, 1.0
  %v749 = vlog2.pop %v748
  %v750 = vmul.f32 %v749, 0.6931472
  %v751 = vmul.f32 -0.5, %v747
  %v752 = vadd.f32 %v751, 1.0
  %v753 = vmul.f32 %v752, %v747
  %v754 = vand.u32 2147483647, %v747
  %vm755 = vcmp.lt.f32.partialorder %v754, 0.0004427343
  %v756 = vsel %vm755, %v753, %v750
  %v757 = vsel %vm744, %v739, %v756
  %vm758 = vcmask 15360
  %759 = vst.msk [vmem:[%s5] sm:$0xff] %vm758, %v757
  // Predicated region
  $region22: #{tpif_cnn_forward.1} parent=0 // pred_check
    _
  $region23: #{tpif_cnn_forward.1} parent=0 // pred_check_branch
    %761 = sbr.rel (0) target = $region25
  $region24: #{tpif_cnn_forward.1} parent=0 // pred_region
    _
  $region25: #{tpif_cnn_forward.1} parent=0 // pred_fallthru
    _
  // Predicated region
  $region26: #{tpif_cnn_forward.1} parent=0 // pred_check
    _
  $region27: #{tpif_cnn_forward.1} parent=0 // pred_check_branch
    %763 = sbr.rel (0) target = $region29
  $region28: #{tpif_cnn_forward.1} parent=0 // pred_region
    _
  $region29: #{tpif_cnn_forward.1} parent=0 // pred_fallthru
    _

</llo_original>
